<compile_context>
chip_gen: v5e
topology: v5e:2x2
jax: 0.10.0
libtpu: 0.0.40
codegen_flags: <defaults>
</compile_context>

<pallas_src>
import jax
import jax.numpy as jnp
from jax.experimental import pallas as pl
from jax.experimental.pallas import tpu as pltpu


def _node_apply_kernel(h_ref, c_ref, wh_ref, wc_ref, b_ref, o_ref):
    # Fused linear: concat([h, c]) @ W == h @ W_h + c @ W_c  (f32 accumulation on MXU).
    z = jnp.dot(h_ref[...], wh_ref[...], preferred_element_type=jnp.float32)
    z = z + jnp.dot(c_ref[...], wc_ref[...], preferred_element_type=jnp.float32)
    z = z + b_ref[...]                                   # f32 bias broadcast over rows

    # F.normalize(p=2, dim=1): v / max(||v||, 1e-12) == v * rsqrt(max(sum(v*v), 1e-24)).
    # Padded output columns are exactly zero (zero weight cols + zero bias), so they do
    # not perturb the row norm.
    sumsq = jnp.sum(z * z, axis=1, keepdims=True)
    inv = jax.lax.rsqrt(jnp.maximum(sumsq, 1e-24))
    z = z * inv

    # activation (ReLU)
    z = jnp.maximum(z, 0.0)

    o_ref[...] = z.astype(o_ref.dtype)


def _vmem_limit_bytes():
    # Conservative fallback (safe on v7x's 64 MiB physical VMEM per TC).
    phys = 64 << 20
    try:
        info = pltpu.get_tpu_info()
        phys = int(getattr(info, "vmem_capacity_bytes", phys))
    except Exception:
        pass
    # Leave ~25% headroom for compiler-internal scratch / spill.
    return int(phys * 3 // 4)


def _pick_tile_rows(N, in_feats, out_pad, in_bytes, out_bytes, vmem_budget):
    """Autoscale the row tile: >= ~1 MiB streamed per grid step, VMEM-capped,
    and small enough that the parallel grid axis has >= 2 steps (megacore)."""
    stream_per_row = 2 * in_feats * in_bytes + out_pad * out_bytes
    target = (1 << 20) // max(stream_per_row, 1)

    per_row_vmem = (2 * (2 * in_feats * in_bytes)     # h + c tiles, double-buffered
                    + 2 * out_pad * out_bytes         # out tile, double-buffered
                    + out_pad * 4)                    # f32 z working set (spills to VMEM)
    resident = 2 * in_feats * out_pad * in_bytes + out_pad * 4
    budget = max(vmem_budget - resident, per_row_vmem * 8)
    cap = budget // per_row_vmem

    tile = min(target, cap, 2048)
    # Give both v7x TensorCores at least one tile each when there are enough rows.
    tile = min(tile, max(pl.cdiv(N, 2), 8))
    tile = max(8, (tile // 8) * 8)
    return int(tile)


def node_apply(h, c, weight, bias, *, compute_dtype=jnp.bfloat16, tile_rows=None):
    """h, c: (N, in_feats); weight: (2*in_feats, out_feats); bias: (out_feats,)."""
    N, in_feats = h.shape
    K = 2 * in_feats
    out_feats = weight.shape[1]
    assert weight.shape[0] == K
    assert c.shape == (N, in_feats)

    out_dtype = h.dtype
    in_bytes = jnp.dtype(compute_dtype).itemsize
    out_bytes = jnp.dtype(out_dtype).itemsize

    # Lane-dense output: pad out_feats to a multiple of 128 (zero weight cols / bias).
    out_pad = pl.cdiv(out_feats, 128) * 128

    vmem_limit = _vmem_limit_bytes()
    if tile_rows is None:
        tile_rows = _pick_tile_rows(N, in_feats, out_pad, in_bytes, out_bytes,
                                    vmem_limit)
    assert tile_rows % 8 == 0

    # Pad N up to the row-tile multiple (no tail masking, tile stays large).
    n_tiles = pl.cdiv(N, tile_rows)
    n_pad = n_tiles * tile_rows

    hp, cp = h, c
    if n_pad != N:
        hp = jnp.pad(hp, ((0, n_pad - N), (0, 0)))
        cp = jnp.pad(cp, ((0, n_pad - N), (0, 0)))
    hp = hp.astype(compute_dtype)
    cp = cp.astype(compute_dtype)

    # Split the weight so no concat of the activations is ever materialized.
    w = weight.astype(compute_dtype)
    w_h = w[:in_feats]
    w_c = w[in_feats:]
    b2d = bias.astype(jnp.float32).reshape(1, out_feats)
    if out_pad != out_feats:
        w_h = jnp.pad(w_h, ((0, 0), (0, out_pad - out_feats)))
        w_c = jnp.pad(w_c, ((0, 0), (0, out_pad - out_feats)))
        b2d = jnp.pad(b2d, ((0, 0), (0, out_pad - out_feats)))

    cost = pl.CostEstimate(
        flops=2 * N * K * out_pad + 5 * N * out_pad,
        transcendentals=N,                            # one rsqrt per row
        bytes_accessed=(in_bytes * (N * K + K * out_pad)
                        + 4 * out_pad
                        + out_bytes * N * out_pad),
    )

    out_padded = pl.pallas_call(
        _node_apply_kernel,
        out_shape=jax.ShapeDtypeStruct((n_pad, out_pad), out_dtype),
        grid_spec=pltpu.PrefetchScalarGridSpec(
            num_scalar_prefetch=0,
            grid=(n_tiles,),
            in_specs=[
                # h / c row tiles (streamed, double-buffered by default)
                pl.BlockSpec((tile_rows, in_feats), lambda i: (i, 0)),
                pl.BlockSpec((tile_rows, in_feats), lambda i: (i, 0)),
                # split weights: constant index_map -> resident; single-buffered
                pl.BlockSpec((in_feats, out_pad), lambda i: (0, 0),
                             pipeline_mode=pl.Buffered(1)),
                pl.BlockSpec((in_feats, out_pad), lambda i: (0, 0),
                             pipeline_mode=pl.Buffered(1)),
                # bias: resident, single-buffered
                pl.BlockSpec((1, out_pad), lambda i: (0, 0),
                             pipeline_mode=pl.Buffered(1)),
            ],
            out_specs=pl.BlockSpec((tile_rows, out_pad), lambda i: (i, 0)),
        ),
        compiler_params=pltpu.CompilerParams(
            dimension_semantics=("parallel",),
            vmem_limit_bytes=int(vmem_limit),
        ),
        cost_estimate=cost,
    )(hp, cp, w_h, w_c, b2d)

    # Skip the pad/slice round-trip when no padding was applied.
    if n_pad == N and out_pad == out_feats:
        return out_padded
    return out_padded[:N, :out_feats]


def node_apply_ref(h, c, weight, bias):
    """Pure-JAX f32 reference mirroring the PyTorch forward."""
    bundle = jnp.concatenate([h, c], axis=1) @ weight + bias
    norm = jnp.sqrt(jnp.sum(bundle * bundle, axis=1, keepdims=True))
    bundle = bundle / jnp.maximum(norm, 1e-12)
    return jnp.maximum(bundle, 0.0)


if __name__ == "__main__":
    key = jax.random.PRNGKey(0)
    k_h, k_c, k_w, k_b = jax.random.split(key, 4)

    N = 64           # number of nodes
    in_feats = 32
    out_feats = 32

    h = jax.random.normal(k_h, (N, in_feats), dtype=jnp.float32)
    c = jax.random.normal(k_c, (N, in_feats), dtype=jnp.float32)

    # Deterministic Linear(in_feats*2, out_feats) params (PyTorch-style uniform init).
    bound = 1.0 / jnp.sqrt(2.0 * in_feats)
    weight = jax.random.uniform(k_w, (2 * in_feats, out_feats),
                                minval=-bound, maxval=bound, dtype=jnp.float32)
    bias = jax.random.uniform(k_b, (out_feats,),
                              minval=-bound, maxval=bound, dtype=jnp.float32)

    out = node_apply(h, c, weight, bias)
    out = jax.block_until_ready(out)
    assert out.shape == (N, out_feats)
    assert out.dtype == h.dtype

    # Reference with inputs quantized to the kernel's bf16 compute dtype, math in f32
    # (mirrors bf16 MXU operands + f32 accumulation).
    def q(x):
        return x.astype(jnp.bfloat16).astype(jnp.float32)
    ref_q = node_apply_ref(q(h), q(c), q(weight), bias)
    assert jnp.allclose(out, ref_q, atol=1e-4, rtol=1e-4), "mismatch vs bf16-quantized ref"

    # Loose check vs the exact f32 PyTorch-equivalent forward (bf16 operand rounding).
    ref_f32 = node_apply_ref(h, c, weight, bias)
    assert jnp.allclose(out, ref_f32, atol=3e-2), "mismatch vs f32 reference"

    print("KERNEL_OK")
</pallas_src>

<mosaic_0001>
module attributes {stable_mosaic.version = 11 : i64} {
  func.func @_node_apply_kernel(%arg0: i32, %arg1: memref<32x32xbf16, #tpu.memory_space<vmem>>, %arg2: memref<32x32xbf16, #tpu.memory_space<vmem>>, %arg3: memref<32x128xbf16, #tpu.memory_space<vmem>>, %arg4: memref<32x128xbf16, #tpu.memory_space<vmem>>, %arg5: memref<1x128xf32, #tpu.memory_space<vmem>>, %arg6: memref<32x128xf32, #tpu.memory_space<vmem>>) attributes {dimension_semantics = [#tpu.dimension_semantics<parallel>], iteration_bounds = array<i64: 2>, scalar_prefetch = 0 : i64, scratch_operands = 0 : i64, tpu.core_type = #tpu.core_type<tc>, window_params = [{transform_indices = @transform_0, window_bounds = array<i64: 32, 32>}, {transform_indices = @transform_1, window_bounds = array<i64: 32, 32>}, {pipeline_mode = #tpu.pipeline_mode<synchronous>, transform_indices = @transform_2, window_bounds = array<i64: 32, 128>}, {pipeline_mode = #tpu.pipeline_mode<synchronous>, transform_indices = @transform_3, window_bounds = array<i64: 32, 128>}, {pipeline_mode = #tpu.pipeline_mode<synchronous>, transform_indices = @transform_4, window_bounds = array<i64: 1, 128>}, {transform_indices = @transform_5, window_bounds = array<i64: 32, 128>}]} {
    %c0 = arith.constant 0 : index
    %c0_0 = arith.constant 0 : index
    %0 = vector.load %arg1[%c0, %c0_0] : memref<32x32xbf16, #tpu.memory_space<vmem>>, vector<32x32xbf16>
    %c0_1 = arith.constant 0 : index
    %c0_2 = arith.constant 0 : index
    %1 = vector.load %arg3[%c0_1, %c0_2] : memref<32x128xbf16, #tpu.memory_space<vmem>>, vector<32x128xbf16>
    %cst = arith.constant dense<0.000000e+00> : vector<32x128xf32>
    %2 = tpu.matmul %0, %1, %cst {dimension_numbers = #tpu.dot_dimension_numbers<[1], [0], [0], [1], [0, 0, 1, 1], [], []>} : vector<32x32xbf16>, vector<32x128xbf16>, vector<32x128xf32> -> vector<32x128xf32>
    %c0_3 = arith.constant 0 : index
    %c0_4 = arith.constant 0 : index
    %3 = vector.load %arg2[%c0_3, %c0_4] : memref<32x32xbf16, #tpu.memory_space<vmem>>, vector<32x32xbf16>
    %c0_5 = arith.constant 0 : index
    %c0_6 = arith.constant 0 : index
    %4 = vector.load %arg4[%c0_5, %c0_6] : memref<32x128xbf16, #tpu.memory_space<vmem>>, vector<32x128xbf16>
    %cst_7 = arith.constant dense<0.000000e+00> : vector<32x128xf32>
    %5 = tpu.matmul %3, %4, %cst_7 {dimension_numbers = #tpu.dot_dimension_numbers<[1], [0], [0], [1], [0, 0, 1, 1], [], []>} : vector<32x32xbf16>, vector<32x128xbf16>, vector<32x128xf32> -> vector<32x128xf32>
    %6 = arith.addf %2, %5 : vector<32x128xf32>
    %c0_8 = arith.constant 0 : index
    %c0_9 = arith.constant 0 : index
    %7 = vector.load %arg5[%c0_8, %c0_9] : memref<1x128xf32, #tpu.memory_space<vmem>>, vector<1x128xf32>
    %8 = vector.broadcast %7 : vector<1x128xf32> to vector<32x128xf32>
    %9 = arith.addf %6, %8 : vector<32x128xf32>
    %10 = arith.mulf %9, %9 : vector<32x128xf32>
    %cst_10 = arith.constant dense<0.000000e+00> : vector<32xf32>
    %11 = vector.multi_reduction <add>, %10, %cst_10 [1] : vector<32x128xf32> to vector<32xf32>
    %12 = vector.shape_cast %11 : vector<32xf32> to vector<32x1xf32>
    %cst_11 = arith.constant 1.000000e-24 : f32
    %13 = vector.broadcast %cst_11 : f32 to vector<32x1xf32>
    %14 = arith.maximumf %12, %13 : vector<32x1xf32>
    %15 = math.rsqrt %14 : vector<32x1xf32>
    %16 = vector.broadcast %15 : vector<32x1xf32> to vector<32x128xf32>
    %17 = arith.mulf %9, %16 : vector<32x128xf32>
    %cst_12 = arith.constant 0.000000e+00 : f32
    %18 = vector.broadcast %cst_12 : f32 to vector<32x128xf32>
    %19 = arith.maximumf %17, %18 : vector<32x128xf32>
    %c0_13 = arith.constant 0 : index
    %c0_14 = arith.constant 0 : index
    %20 = vector.load %arg6[%c0_13, %c0_14] : memref<32x128xf32, #tpu.memory_space<vmem>>, vector<32x128xf32>
    tpu.vector_store %arg6[%c0_13, %c0_14], %19 {strides = array<i32>} : memref<32x128xf32, #tpu.memory_space<vmem>>, vector<32x128xf32>,
    return
  }
  func.func @transform_0(%arg0: i32) -> (i32, i32) {
    %c0_i32 = arith.constant 0 : i32
    %c0_i32_0 = arith.constant 0 : i32
    return %arg0, %c0_i32 : i32, i32
  }
  func.func @transform_1(%arg0: i32) -> (i32, i32) {
    %c0_i32 = arith.constant 0 : i32
    %c0_i32_0 = arith.constant 0 : i32
    return %arg0, %c0_i32 : i32, i32
  }
  func.func @transform_2(%arg0: i32) -> (i32, i32) {
    %c0_i32 = arith.constant 0 : i32
    %c0_i32_0 = arith.constant 0 : i32
    %c0_i32_1 = arith.constant 0 : i32
    return %c0_i32, %c0_i32_0 : i32, i32
  }
  func.func @transform_3(%arg0: i32) -> (i32, i32) {
    %c0_i32 = arith.constant 0 : i32
    %c0_i32_0 = arith.constant 0 : i32
    %c0_i32_1 = arith.constant 0 : i32
    return %c0_i32, %c0_i32_0 : i32, i32
  }
  func.func @transform_4(%arg0: i32) -> (i32, i32) {
    %c0_i32 = arith.constant 0 : i32
    %c0_i32_0 = arith.constant 0 : i32
    %c0_i32_1 = arith.constant 0 : i32
    return %c0_i32, %c0_i32_0 : i32, i32
  }
  func.func @transform_5(%arg0: i32) -> (i32, i32) {
    %c0_i32 = arith.constant 0 : i32
    %c0_i32_0 = arith.constant 0 : i32
    return %arg0, %c0_i32 : i32, i32
  }
}

</mosaic_0001>

<llo_original>
// kernel: tpu_custom_call.1
$region0: #{tpu_custom_call.1}
  #allocation0 [shape = 'u32[]', space=smem, size = 0x4, offset = 0x4, fixed_abs, tag = 'smem constant byte address 0x4 - core index']
  #allocation1 [shape = 'u32[72,128]{1,0:T(1,128)}', space=vmem, size = 0x9000, scoped, tag = 'internal scratch']
  %s0 = inlined_call_operand.vmem [shape: bf16[64,32], index: 0, kind: input, shape index: {}]
  %s1 = inlined_call_operand.vmem [shape: bf16[64,32], index: 1, kind: input, shape index: {}]
  %s2 = inlined_call_operand.vmem [shape: bf16[32,128], index: 2, kind: input, shape index: {}]
  %s3 = inlined_call_operand.vmem [shape: bf16[32,128], index: 3, kind: input, shape index: {}]
  %s4 = inlined_call_operand.vmem [shape: f32[1,128], index: 4, kind: input, shape index: {}]
  %s5 = inlined_call_operand.hbm [shape: f32[64,128], index: 5, kind: output, shape index: {}]
  %s6 = sld [smem:[#allocation0]]
  $region53: #{tpu_custom_call.1} parent=0
    _
  %s8 = ssub.s32 1, %s6
  %s9 = scalar_select 0, %s8, %s6
  $region1: #{tpu_custom_call.1} parent=0
    #allocation2 [shape = 'u8[32768]{0}', space=vmem, size = 0x8000, scoped, tag = 'output window, operand 0']
    #allocation3 [shape = 's32[2]{0}', space=sflag, size = 0x8, scoped, tag = 'scoped memory for tpu_custom_call.1']
    %10 = vsyncpa [#allocation3], 0
    %s11 = scalar_lea.sflag [#allocation3], 1
    %12 = vsyncpa %s11, 0
    loop: start=0, step=1, limit=4
    $region2: #{tpu_custom_call.1} parent=1 // loop_pre_header
      _
    $region3: #{tpu_custom_call.1} parent=1 // loop_header
      %s14 = sphi 0, %s18
      %p15 = scmp.ge.s32.totalorder %s14, 4
      %s24 = sphi 0, %s26
      %s27 = sphi 0, %s24
      %s28 = sphi 0, %s27
      %s44 = sphi 0, %s28
      %s50 = sphi 0, %s52
      %s53 = sphi 0, %s50
      %s54 = sphi 0, %s53
      %s70 = sphi 0, %s54
      %s74 = sphi 0, %s74
      %s76 = sphi 0, %s74
      %s77 = sphi 0, %s76
      %s91 = sphi 0, %s77
      %s95 = sphi 0, %s95
      %s97 = sphi 0, %s95
      %s98 = sphi 0, %s97
      %s112 = sphi 0, %s98
      %s116 = sphi 0, %s116
      %s118 = sphi 0, %s116
      %s119 = sphi 0, %s118
      %s133 = sphi 0, %s119
      %s139 = sphi 0, %s141
      %s142 = sphi 0, %s139
      %s143 = sphi 0, %s142
      %s159 = sphi 0, %s143
    $region4: #{tpu_custom_call.1} parent=1 // loop_header_branch
      %17 = sbr.rel (%p15) target = $region8
    $region5: #{tpu_custom_call.1} parent=1 // loop_body
      %s19 = ssub.s32 %s14, 1
      %s20 = ssub.s32 %s14, 2
      %s21 = sadd.s32 %s14, 1
      %s22 = ssub.s32 %s14, %s21
      %p23 = scmp.eq.s32.totalorder %s22, 0
      %s25 = sadd.s32 %s24, 1
      %s26 = scalar_select %p23, %s24, %s25
      %p29 = pneg %p23
      %p30 = scmp.eq.s32.totalorder %s14, 1
      %p31 = por %p29, %p30
      %p32 = scmp.ne.s32.totalorder %s24, %s27
      %p33 = scmp.eq.s32.totalorder %s14, 0
      %p34 = por %p32, %p33
      %p35 = scmp.ne.s32.totalorder %s24, %s27
      %p36 = scmp.eq.s32.totalorder %s19, 1
      %p37 = por %p35, %p36
      %p38 = scmp.ne.s32.totalorder %s27, %s28
      %p39 = scmp.eq.s32.totalorder %s19, 0
      %p40 = por %p38, %p39
      %p41 = scmp.ne.s32.totalorder %s27, %s28
      %p42 = scmp.eq.s32.totalorder %s20, 1
      %p43 = por %p41, %p42
      %p45 = scmp.ne.s32.totalorder %s28, %s44
      %p46 = scmp.eq.s32.totalorder %s20, 0
      %p47 = por %p45, %p46
      %s48 = ssub.s32 %s14, %s21
      %p49 = scmp.eq.s32.totalorder %s48, 0
      %s51 = sadd.s32 %s50, 1
      %s52 = scalar_select %p49, %s50, %s51
      %p55 = pneg %p49
      %p56 = scmp.eq.s32.totalorder %s14, 1
      %p57 = por %p55, %p56
      %p58 = scmp.ne.s32.totalorder %s50, %s53
      %p59 = scmp.eq.s32.totalorder %s14, 0
      %p60 = por %p58, %p59
      %p61 = scmp.ne.s32.totalorder %s50, %s53
      %p62 = scmp.eq.s32.totalorder %s19, 1
      %p63 = por %p61, %p62
      %p64 = scmp.ne.s32.totalorder %s53, %s54
      %p65 = scmp.eq.s32.totalorder %s19, 0
      %p66 = por %p64, %p65
      %p67 = scmp.ne.s32.totalorder %s53, %s54
      %p68 = scmp.eq.s32.totalorder %s20, 1
      %p69 = por %p67, %p68
      %p71 = scmp.ne.s32.totalorder %s54, %s70
      %p72 = scmp.eq.s32.totalorder %s20, 0
      %p73 = por %p71, %p72
      %s75 = sadd.s32 %s74, 1
      %p78 = scmp.eq.s32.totalorder %s14, 1
      %p79 = scmp.ne.s32.totalorder %s74, %s76
      %p80 = scmp.eq.s32.totalorder %s14, 0
      %p81 = por %p79, %p80
      %p82 = scmp.ne.s32.totalorder %s74, %s76
      %p83 = scmp.eq.s32.totalorder %s19, 1
      %p84 = por %p82, %p83
      %p85 = scmp.ne.s32.totalorder %s76, %s77
      %p86 = scmp.eq.s32.totalorder %s19, 0
      %p87 = por %p85, %p86
      %p88 = scmp.ne.s32.totalorder %s76, %s77
      %p89 = scmp.eq.s32.totalorder %s20, 1
      %p90 = por %p88, %p89
      %p92 = scmp.ne.s32.totalorder %s77, %s91
      %p93 = scmp.eq.s32.totalorder %s20, 0
      %p94 = por %p92, %p93
      %s96 = sadd.s32 %s95, 1
      %p99 = scmp.eq.s32.totalorder %s14, 1
      %p100 = scmp.ne.s32.totalorder %s95, %s97
      %p101 = scmp.eq.s32.totalorder %s14, 0
      %p102 = por %p100, %p101
      %p103 = scmp.ne.s32.totalorder %s95, %s97
      %p104 = scmp.eq.s32.totalorder %s19, 1
      %p105 = por %p103, %p104
      %p106 = scmp.ne.s32.totalorder %s97, %s98
      %p107 = scmp.eq.s32.totalorder %s19, 0
      %p108 = por %p106, %p107
      %p109 = scmp.ne.s32.totalorder %s97, %s98
      %p110 = scmp.eq.s32.totalorder %s20, 1
      %p111 = por %p109, %p110
      %p113 = scmp.ne.s32.totalorder %s98, %s112
      %p114 = scmp.eq.s32.totalorder %s20, 0
      %p115 = por %p113, %p114
      %s117 = sadd.s32 %s116, 1
      %p120 = scmp.eq.s32.totalorder %s14, 1
      %p121 = scmp.ne.s32.totalorder %s116, %s118
      %p122 = scmp.eq.s32.totalorder %s14, 0
      %p123 = por %p121, %p122
      %p124 = scmp.ne.s32.totalorder %s116, %s118
      %p125 = scmp.eq.s32.totalorder %s19, 1
      %p126 = por %p124, %p125
      %p127 = scmp.ne.s32.totalorder %s118, %s119
      %p128 = scmp.eq.s32.totalorder %s19, 0
      %p129 = por %p127, %p128
      %p130 = scmp.ne.s32.totalorder %s118, %s119
      %p131 = scmp.eq.s32.totalorder %s20, 1
      %p132 = por %p130, %p131
      %p134 = scmp.ne.s32.totalorder %s119, %s133
      %p135 = scmp.eq.s32.totalorder %s20, 0
      %p136 = por %p134, %p135
      %s137 = ssub.s32 %s14, %s21
      %p138 = scmp.eq.s32.totalorder %s137, 0
      %s140 = sadd.s32 %s139, 1
      %s141 = scalar_select %p138, %s139, %s140
      %p144 = pneg %p138
      %p145 = scmp.eq.s32.totalorder %s14, 1
      %p146 = por %p144, %p145
      %p147 = scmp.ne.s32.totalorder %s139, %s142
      %p148 = scmp.eq.s32.totalorder %s14, 0
      %p149 = por %p147, %p148
      %p150 = scmp.ne.s32.totalorder %s139, %s142
      %p151 = scmp.eq.s32.totalorder %s19, 1
      %p152 = por %p150, %p151
      %p153 = scmp.ne.s32.totalorder %s142, %s143
      %p154 = scmp.eq.s32.totalorder %s19, 0
      %p155 = por %p153, %p154
      %p156 = scmp.ne.s32.totalorder %s142, %s143
      %p157 = scmp.eq.s32.totalorder %s20, 1
      %p158 = por %p156, %p157
      %p160 = scmp.ne.s32.totalorder %s143, %s159
      %p161 = scmp.eq.s32.totalorder %s20, 0
      %p162 = por %p160, %p161
      %p163 = scmp.le.s32.totalorder 1, %s14
      %p164 = scmp.lt.s32.totalorder %s14, 3
      %p165 = pnand %p163, %p164
      %p166 = pneg %p165
      // Predicated region
      $region9: #{tpu_custom_call.1} parent=5 // pred_check
        _
      $region10: #{tpu_custom_call.1} parent=5 // pred_check_branch
        %168 = sbr.rel (%p165) target = $region12
      $region11: #{tpu_custom_call.1} parent=5 // pred_region
        %s169 = ssub.s32 %s14, 1
        // Predicated region
        $region13: #{tpu_custom_call.1} parent=11 // pred_check
          %p170 = pneg %p87
        $region14: #{tpu_custom_call.1} parent=11 // pred_check_branch
          %172 = sbr.rel (%p170) target = $region16
        $region15: #{tpu_custom_call.1} parent=11 // pred_region
          _
        $region16: #{tpu_custom_call.1} parent=11 // pred_fallthru
          _
        // Predicated region
        $region17: #{tpu_custom_call.1} parent=11 // pred_check
          %p173 = pneg %p108
        $region18: #{tpu_custom_call.1} parent=11 // pred_check_branch
          %175 = sbr.rel (%p173) target = $region20
        $region19: #{tpu_custom_call.1} parent=11 // pred_region
          _
        $region20: #{tpu_custom_call.1} parent=11 // pred_fallthru
          _
        // Predicated region
        $region21: #{tpu_custom_call.1} parent=11 // pred_check
          %p176 = pneg %p129
        $region22: #{tpu_custom_call.1} parent=11 // pred_check_branch
          %178 = sbr.rel (%p176) target = $region24
        $region23: #{tpu_custom_call.1} parent=11 // pred_region
          _
        $region24: #{tpu_custom_call.1} parent=11 // pred_fallthru
          _
      $region12: #{tpu_custom_call.1} parent=5 // pred_fallthru
        _
      %p179 = scmp.lt.s32.totalorder %s14, 2
      // Predicated region
      $region25: #{tpu_custom_call.1} parent=5 // pred_check
        %p180 = pneg %p179
      $region26: #{tpu_custom_call.1} parent=5 // pred_check_branch
        %182 = sbr.rel (%p180) target = $region28
      $region27: #{tpu_custom_call.1} parent=5 // pred_region
        // Predicated region
        $region29: #{tpu_custom_call.1} parent=27 // pred_check
          %p183 = pneg %p34
        $region30: #{tpu_custom_call.1} parent=27 // pred_check_branch
          %185 = sbr.rel (%p183) target = $region32
        $region31: #{tpu_custom_call.1} parent=27 // pred_region
          %s186 = smul.u32 4, %s14
          %p187 = scmp.lt.s32.totalorder %s186, 7
          %s188 = scalar_select %p187, %s186, 7
          %s189 = smul.addr %s188, 4
          %s190 = scalar_lea.vmem %s0, %s189
          %s191 = smul.u32 4, %s14
        $region32: #{tpu_custom_call.1} parent=27 // pred_fallthru
          _
        // Predicated region
        $region33: #{tpu_custom_call.1} parent=27 // pred_check
          %p192 = pneg %p60
        $region34: #{tpu_custom_call.1} parent=27 // pred_check_branch
          %194 = sbr.rel (%p192) target = $region36
        $region35: #{tpu_custom_call.1} parent=27 // pred_region
          %s195 = smul.u32 4, %s14
          %p196 = scmp.lt.s32.totalorder %s195, 7
          %s197 = scalar_select %p196, %s195, 7
          %s198 = smul.addr %s197, 4
          %s199 = scalar_lea.vmem %s1, %s198
          %s200 = smul.u32 4, %s14
        $region36: #{tpu_custom_call.1} parent=27 // pred_fallthru
          _
      $region28: #{tpu_custom_call.1} parent=5 // pred_fallthru
        _
      %p201 = scmp.le.s32.totalorder 1, %s14
      %p202 = scmp.lt.s32.totalorder %s14, 3
      %p203 = pnand %p201, %p202
      %p204 = pneg %p203
      // Predicated region
      $region37: #{tpu_custom_call.1} parent=5 // pred_check
        _
      $region38: #{tpu_custom_call.1} parent=5 // pred_check_branch
        %206 = sbr.rel (%p203) target = $region40
      $region39: #{tpu_custom_call.1} parent=5 // pred_region
        %s207 = ssub.s32 %s14, 1
        %s208 = smul.u32 4, %s19
        %p209 = scmp.lt.s32.totalorder %s208, 7
        %s210 = scalar_select %p209, %s208, 7
        %s211 = smul.addr %s210, 4
        %s212 = scalar_lea.vmem %s0, %s211
        %p213 = pneg %p40
        %p214 = pneg %p37
        %s215 = smul.u32 4, %s19
        %p216 = scmp.lt.s32.totalorder %s215, 7
        %s217 = scalar_select %p216, %s215, 7
        %s218 = smul.addr %s217, 4
        %s219 = scalar_lea.vmem %s1, %s218
        %p220 = pneg %p66
        %p221 = pneg %p63
        %p222 = pneg %p87
        %p223 = pneg %p84
        %p224 = pneg %p108
        %p225 = pneg %p105
        %p226 = pneg %p129
        %p227 = pneg %p126
        %p228 = pneg %p155
        %p229 = pneg %p152
        %s230 = sand.u32 %s142, 1
        %s231 = scalar_lea.sflag [#allocation3], %s230
        %s232 = sand.u32 %s142, 1
        %s233 = smul.addr %s232, 32
        %s234 = scalar_lea.vmem [#allocation2], %s233
        %s235 = smul.u32 4, %s19
        %p236 = scmp.lt.s32.totalorder %s235, 7
        %s237 = scalar_select %p236, %s235, 7
        %s238 = smul.addr %s237, 4
        %s239 = scalar_lea.vmem %s0, %s238
        %s240 = smul.u32 4, %s19
        %s241 = smul.u32 4, %s19
        %p242 = scmp.lt.s32.totalorder %s241, 7
        %s243 = scalar_select %p242, %s241, 7
        %s244 = smul.addr %s243, 4
        %s245 = scalar_lea.vmem %s1, %s244
        %s246 = smul.u32 4, %s19
        %s247 = smul.u32 4, %s19
        %v249 = vld [vmem:[%s239] sm:$0xf]
        %v250 = vld [vmem:[%s239 + $0x4] sm:$0xf]
        %v251 = vld [vmem:[%s239 + $0x8] sm:$0xf]
        %v252 = vld [vmem:[%s239 + $0xc] sm:$0xf]
        %v253 = vld [vmem:[%s2] sm:$0xf]
        %v254 = vld [vmem:[%s2 + $0x4] sm:$0xf]
        %v255 = vld [vmem:[%s2 + $0x8] sm:$0xf]
        %v256 = vld [vmem:[%s2 + $0xc] sm:$0xf]
        %v257 = vld [vmem:[%s245] sm:$0xf]
        %v258 = vld [vmem:[%s245 + $0x4] sm:$0xf]
        %v259 = vld [vmem:[%s245 + $0x8] sm:$0xf]
        %v260 = vld [vmem:[%s245 + $0xc] sm:$0xf]
        %v261 = vld [vmem:[%s3] sm:$0xf]
        %v262 = vld [vmem:[%s3 + $0x4] sm:$0xf]
        %v263 = vld [vmem:[%s3 + $0x8] sm:$0xf]
        %v264 = vld [vmem:[%s3 + $0xc] sm:$0xf]
        %v269 = vunpack.c.l.b16 %v257
        %v270 = vunpack.c.l.b16 %v258
        %v271 = vunpack.c.l.b16 %v259
        %v272 = vunpack.c.l.b16 %v260
        %v273 = vpack.c.b16 %v270, %v269
        %v274 = vpack.c.b16 %v272, %v271
        %v279 = vunpack.c.l.b16 %v261
        %v280 = vunpack.c.l.b16 %v262
        %v281 = vunpack.c.l.b16 %v263
        %v282 = vunpack.c.l.b16 %v264
        %v283 = vpack.c.b16 %v280, %v279
        %v284 = vpack.c.b16 %v282, %v281
        %vm287 = vcmask 261120
        %v289 = vsel %vm287, %v273, 0
        %v292 = vsel %vm287, %v274, 0
        %294 = vmatpush.bf16.msra.mxu0 0
        %295 = vmatpush.bf16.msra.mxu0 0
        %296 = vmatpush.bf16.msra.mxu0 0
        %297 = vmatpush.bf16.msra.mxu0 0
        %298 = vmatpush.bf16.msra.mxu0 0
        %299 = vmatpush.bf16.msra.mxu0 0
        %300 = vmatpush.bf16.msra.mxu0 %v284
        %301 = vmatpush.bf16.msra.mxu0 %v283
        %302 = vmatmul.bf16.gmra.mxu0 %v289
        %v303 = vpop.f32.mrf.mxu0
        %v304 = vadd.f32 0.0, %v303
        %v305 = vpop.f32.mrf.mxu0
        %v306 = vadd.f32 0.0, %v305
        %307 = vmatmul.bf16.gmra.mxu0 %v292
        %v308 = vpop.f32.mrf.mxu0
        %v309 = vadd.f32 0.0, %v308
        %v310 = vpop.f32.mrf.mxu0
        %v311 = vadd.f32 0.0, %v310
        %312 = vdwg.mxu0
        %v317 = vunpack.c.l.b16 %v249
        %v318 = vunpack.c.l.b16 %v250
        %v319 = vunpack.c.l.b16 %v251
        %v320 = vunpack.c.l.b16 %v252
        %v321 = vpack.c.b16 %v318, %v317
        %v322 = vpack.c.b16 %v320, %v319
        %v327 = vunpack.c.l.b16 %v253
        %v328 = vunpack.c.l.b16 %v254
        %v329 = vunpack.c.l.b16 %v255
        %v330 = vunpack.c.l.b16 %v256
        %v331 = vpack.c.b16 %v328, %v327
        %v332 = vpack.c.b16 %v330, %v329
        %v336 = vsel %vm287, %v321, 0
        %v339 = vsel %vm287, %v322, 0
        %341 = vmatpush.bf16.msra.mxu0 0
        %342 = vmatpush.bf16.msra.mxu0 0
        %343 = vmatpush.bf16.msra.mxu0 0
        %344 = vmatpush.bf16.msra.mxu0 0
        %345 = vmatpush.bf16.msra.mxu0 0
        %346 = vmatpush.bf16.msra.mxu0 0
        %347 = vmatpush.bf16.msra.mxu0 %v332
        %348 = vmatpush.bf16.msra.mxu0 %v331
        %349 = vmatmul.bf16.gmra.mxu0 %v336
        %v350 = vpop.f32.mrf.mxu0
        %v351 = vadd.f32 %v304, %v350
        %v352 = vpop.f32.mrf.mxu0
        %v353 = vadd.f32 %v306, %v352
        %354 = vmatmul.bf16.gmra.mxu0 %v339
        %v355 = vpop.f32.mrf.mxu0
        %v356 = vadd.f32 %v309, %v355
        %v357 = vpop.f32.mrf.mxu0
        %v358 = vadd.f32 %v311, %v357
        %359 = vdwg.mxu0
        %v360 = vld [vmem:[%s4] sm:$0x1]
        %v362 = vperm.slane %v360, 0
        %v364 = vadd.f32 %v351, %v362
        %v365 = vadd.f32 %v353, %v362
        %v366 = vadd.f32 %v356, %v362
        %v367 = vadd.f32 %v358, %v362
        %v368 = vmul.f32 %v364, %v364
        %v369 = vmul.f32 %v365, %v365
        %v370 = vmul.f32 %v366, %v366
        %v371 = vmul.f32 %v367, %v367
        %372 = vadd.xlane.f32.xlu0 %v368
        %v373 = vpop.xlane.xlu0 %372
        %374 = vadd.xlane.f32.xlu0 %v369
        %v375 = vpop.xlane.xlu0 %374
        %376 = vadd.xlane.f32.xlu0 %v370
        %v377 = vpop.xlane.xlu0 %376
        %378 = vadd.xlane.f32.xlu0 %v371
        %v379 = vpop.xlane.xlu0 %378
        %v380 = vmax.f32 %v373, 1e-24
        %v381 = vmax.f32 %v375, 1e-24
        %v382 = vmax.f32 %v377, 1e-24
        %v383 = vmax.f32 %v379, 1e-24
        %v384 = vrsqrt.pop %v380
        %v385 = vmul.f32 %v384, %v380
        %v386 = vmul.f32 %v385, %v384
        %v387 = vmul.f32 0.5, %v386
        %v388 = vsub.f32 1.5, %v387
        %v389 = vmul.f32 %v384, %v388
        %vm390 = vweird.f32 %v380
        %vm391 = vweird.f32 %v384
        %vm392 = vmor %vm390, %vm391
        %v393 = vsel %vm392, %v384, %v389
        %v394 = vrsqrt.pop %v381
        %v395 = vmul.f32 %v394, %v381
        %v396 = vmul.f32 %v395, %v394
        %v397 = vmul.f32 0.5, %v396
        %v398 = vsub.f32 1.5, %v397
        %v399 = vmul.f32 %v394, %v398
        %vm400 = vweird.f32 %v381
        %vm401 = vweird.f32 %v394
        %vm402 = vmor %vm400, %vm401
        %v403 = vsel %vm402, %v394, %v399
        %v404 = vrsqrt.pop %v382
        %v405 = vmul.f32 %v404, %v382
        %v406 = vmul.f32 %v405, %v404
        %v407 = vmul.f32 0.5, %v406
        %v408 = vsub.f32 1.5, %v407
        %v409 = vmul.f32 %v404, %v408
        %vm410 = vweird.f32 %v382
        %vm411 = vweird.f32 %v404
        %vm412 = vmor %vm410, %vm411
        %v413 = vsel %vm412, %v404, %v409
        %v414 = vrsqrt.pop %v383
        %v415 = vmul.f32 %v414, %v383
        %v416 = vmul.f32 %v415, %v414
        %v417 = vmul.f32 0.5, %v416
        %v418 = vsub.f32 1.5, %v417
        %v419 = vmul.f32 %v414, %v418
        %vm420 = vweird.f32 %v383
        %vm421 = vweird.f32 %v414
        %vm422 = vmor %vm420, %vm421
        %v423 = vsel %vm422, %v414, %v419
        %v424 = vmul.f32 %v364, %v393
        %v425 = vmul.f32 %v365, %v403
        %v426 = vmul.f32 %v366, %v413
        %v427 = vmul.f32 %v367, %v423
        %v428 = vmax.f32 %v424, 0.0
        %v429 = vmax.f32 %v425, 0.0
        %v430 = vmax.f32 %v426, 0.0
        %v431 = vmax.f32 %v427, 0.0
        %432 = vst [vmem:[%s234] sm:$0xff] %v428
        %433 = vst [vmem:[%s234 + $0x8] sm:$0xff] %v429
        %434 = vst [vmem:[%s234 + $0x10] sm:$0xff] %v430
        %435 = vst [vmem:[%s234 + $0x18] sm:$0xff] %v431
        %s436 = sand.u32 %s142, 1
        %s437 = scalar_lea.sflag [#allocation3], %s436
        %s438 = sand.u32 %s142, 1
        %s439 = smul.addr %s438, 32
        %s440 = scalar_lea.vmem [#allocation2], %s439
        // Predicated region
        $region41: #{tpu_custom_call.1} parent=39 // pred_check
          %p441 = pneg %p152
        $region42: #{tpu_custom_call.1} parent=39 // pred_check_branch
          %443 = sbr.rel (%p441) target = $region44
        $region43: #{tpu_custom_call.1} parent=39 // pred_region
          %s444 = smul.u32 4, %s19
          %446 = vsyncadd %s437, 0
          %s447 = smul.addr %s444, 8
          %s448 = scalar_lea.hbm %s5, %s447
          %s449 = sshll.u32 %s440, 4
          %s450 = int_to_ptr.vmem [resolvable:$true] %s449
          %s451 = sshll.u32 %s448, 4
          %s452 = int_to_ptr.hbm [resolvable:$true] %s451
          %457 = dma.vmem_to_hbm [thread:$0]  %s450, 512, %s452, %s437, 128, 128, 8
        $region44: #{tpu_custom_call.1} parent=39 // pred_fallthru
          _
      $region40: #{tpu_custom_call.1} parent=5 // pred_fallthru
        _
      %p458 = scmp.le.s32.totalorder 2, %s14
      // Predicated region
      $region45: #{tpu_custom_call.1} parent=5 // pred_check
        %p459 = pneg %p458
      $region46: #{tpu_custom_call.1} parent=5 // pred_check_branch
        %461 = sbr.rel (%p459) target = $region48
      $region47: #{tpu_custom_call.1} parent=5 // pred_region
        %s462 = ssub.s32 %s14, 2
        // Predicated region
        $region49: #{tpu_custom_call.1} parent=47 // pred_check
          %p463 = pneg %p158
        $region50: #{tpu_custom_call.1} parent=47 // pred_check_branch
          %465 = sbr.rel (%p463) target = $region52
        $region51: #{tpu_custom_call.1} parent=47 // pred_region
          %s466 = sand.u32 %s143, 1
          %s467 = scalar_lea.sflag [#allocation3], %s466
          %s468 = sand.u32 %s143, 1
          %s469 = smul.addr %s468, 32
          %s470 = scalar_lea.vmem [#allocation2], %s469
          %472 = dma.done %s467, 512
        $region52: #{tpu_custom_call.1} parent=47 // pred_fallthru
          _
      $region48: #{tpu_custom_call.1} parent=5 // pred_fallthru
        _
    $region6: #{tpu_custom_call.1} parent=1 // loop_footer
      %s18 = sadd.s32 1, %s14
    $region7: #{tpu_custom_call.1} parent=1 // loop_footer_branch
      %13 = sbr.rel target = $region3
    $region8: #{tpu_custom_call.1} parent=1 // loop_exit
      _
    %473 = vsyncpa [#allocation3], 1
    %s474 = scalar_lea.sflag [#allocation3], 1
    %475 = vsyncpa %s474, 1

</llo_original>
